<compile_context>
chip_gen: v5e
topology: v5e:2x2
jax: 0.10.0
libtpu: 0.0.40
codegen_flags: <defaults>
</compile_context>

<pallas_src>
import numpy as np
import jax
import jax.numpy as jnp
from jax.experimental import pallas as pl
from jax.experimental.pallas import tpu as pltpu


def _round_up(x, m):
    return (x + m - 1) // m * m


# ---------------------------------------------------------------------------
# Pallas kernel: one fused, lane-dense contraction per N-tile
#   o[TN, Cout_pad] = x[TN, KC_pad] @ w[KC_pad, Cout_pad]
# ---------------------------------------------------------------------------
def sparse_conv_kernel(x_ref, w_ref, o_ref):
    o_ref[...] = jnp.dot(
        x_ref[...], w_ref[...], preferred_element_type=jnp.float32
    ).astype(o_ref.dtype)


def minkowski_conv_pallas(gathered, weights, *, tile_n=512,
                          compute_dtype=jnp.float32):
    """gathered: (K, N, Cin) zero-padded neighbor features (K = kernel volume)
       weights:  (K, Cin, Cout)
       returns:  (N, Cout) float32
    """
    K, N, Cin = gathered.shape
    Cout = weights.shape[-1]

    # ---- Fuse the K kernel offsets into one contraction axis (K*Cin) -------
    x = jnp.transpose(gathered, (1, 0, 2)).reshape(N, K * Cin)   # (N, K*Cin)
    w = weights.reshape(K * Cin, Cout)                           # (K*Cin, Cout)

    # ---- Pad to MXU / lane-friendly shapes ---------------------------------
    KC = K * Cin
    KC_pad = _round_up(KC, 128)          # contraction dim (zeros contribute 0)
    Cout_pad = _round_up(Cout, 128)      # lane-dense output (no masked stores)
    TN = min(tile_n, _round_up(N, 8))    # rows per grid step (VMEM-bounded)
    N_pad = _round_up(N, TN)

    x = jnp.pad(x, ((0, N_pad - N), (0, KC_pad - KC))).astype(compute_dtype)
    w = jnp.pad(w, ((0, KC_pad - KC), (0, Cout_pad - Cout))).astype(compute_dtype)

    grid = (N_pad // TN,)
    itemsize = jnp.dtype(compute_dtype).itemsize
    cost = pl.CostEstimate(
        flops=2 * N_pad * KC_pad * Cout_pad,
        transcendentals=0,
        bytes_accessed=(N_pad * KC_pad * itemsize
                        + KC_pad * Cout_pad * itemsize
                        + N_pad * Cout_pad * 4),
    )

    out = pl.pallas_call(
        sparse_conv_kernel,
        out_shape=jax.ShapeDtypeStruct((N_pad, Cout_pad), jnp.float32),
        grid_spec=pltpu.PrefetchScalarGridSpec(
            num_scalar_prefetch=0,
            grid=grid,
            in_specs=[
                # activations: one (TN, KC_pad) tile per grid step
                pl.BlockSpec((TN, KC_pad), lambda i: (i, 0)),
                # weights: single resident slab shared by every grid step
                pl.BlockSpec((KC_pad, Cout_pad), lambda i: (0, 0)),
            ],
            out_specs=pl.BlockSpec((TN, Cout_pad), lambda i: (i, 0)),
        ),
        compiler_params=pltpu.CompilerParams(
            dimension_semantics=("parallel",),   # megacore shards N on v7x
            vmem_limit_bytes=32 * 1024 * 1024,   # tiles sized well under v7x 64 MiB
        ),
        cost_estimate=cost,
    )(x, w)

    return out[:N, :Cout]


# ---------------------------------------------------------------------------
# Glue: build the kernel map (neighbor index per offset) and gather features.
# TODO(synk): at production N (1e5-1e6 points) the gather should move in-kernel
#   (scalar-prefetched idx_map in SMEM + VMEM-resident feats / DMA gather) to
#   avoid materializing the 27x-expanded gathered tensor in HBM.
# ---------------------------------------------------------------------------
def build_kernel_map(coords_np):
    """coords_np: (N,4) int array of (batch, x, y, z).
       Returns idx_map (27, N) int32 (-1 where neighbor absent)."""
    coord_to_idx = {tuple(int(v) for v in c): i for i, c in enumerate(coords_np)}
    offsets = [(dx, dy, dz)
               for dx in (-1, 0, 1)
               for dy in (-1, 0, 1)
               for dz in (-1, 0, 1)]
    N = coords_np.shape[0]
    idx_map = np.full((len(offsets), N), -1, dtype=np.int32)
    for k, (dx, dy, dz) in enumerate(offsets):
        for i, (b, x, y, z) in enumerate(coords_np):
            key = (int(b), int(x) + dx, int(y) + dy, int(z) + dz)
            idx_map[k, i] = coord_to_idx.get(key, -1)
    return idx_map


def convnet_forward(coords_np, feats, weights, *, compute_dtype=jnp.float32):
    """Forward pass of Convnet (sparse 3-D conv, kernel 3, stride 1, no bias)."""
    idx_map = jnp.asarray(build_kernel_map(coords_np))           # (27, N)
    valid = (idx_map >= 0)[..., None]                            # (27, N, 1)
    safe_idx = jnp.clip(idx_map, 0, feats.shape[0] - 1)
    gathered = jnp.where(valid, feats[safe_idx], 0.0)            # (27, N, Cin)
    return minkowski_conv_pallas(gathered, weights,
                                 compute_dtype=compute_dtype)


# ---------------------------------------------------------------------------
# Main
# ---------------------------------------------------------------------------
if __name__ == "__main__":
    in_channels, out_channels = 4, 8
    batch, side = 2, 4                       # 2 batches of a 4x4x4 occupied grid
    N = batch * side ** 3                    # 128 sparse points

    # Deterministic sparse coordinates: fully-occupied small cubes.
    bs, xs, ys, zs = np.meshgrid(
        np.arange(batch), np.arange(side), np.arange(side), np.arange(side),
        indexing="ij",
    )
    coords_np = np.stack(
        [bs.ravel(), xs.ravel(), ys.ravel(), zs.ravel()], axis=1
    ).astype(np.int32)                       # (N, 4)

    # Deterministic features and parameters.
    key = jax.random.PRNGKey(0)
    k_feat, k_w = jax.random.split(key)
    feats = jax.random.normal(k_feat, (N, in_channels), dtype=jnp.float32)
    # MinkowskiConvolution weight: (kernel_volume, in_channels, out_channels)
    fan_in = 27 * in_channels
    weights = jax.random.normal(
        k_w, (27, in_channels, out_channels), dtype=jnp.float32
    ) * (1.0 / np.sqrt(fan_in))

    # --- f32 path (matches PyTorch module dtype) ----------------------------
    out = convnet_forward(coords_np, feats, weights,
                          compute_dtype=jnp.float32)
    out = jax.block_until_ready(out)

    # Reference check (plain JAX) for the same sparse conv.
    idx_map = jnp.asarray(build_kernel_map(coords_np))
    valid = (idx_map >= 0)[..., None]
    gathered_ref = jnp.where(valid, feats[jnp.clip(idx_map, 0, N - 1)], 0.0)
    ref = jnp.einsum("knc,kcd->nd", gathered_ref, weights)
    assert out.shape == (N, out_channels)
    np.testing.assert_allclose(np.asarray(out), np.asarray(ref),
                               rtol=1e-4, atol=1e-4)

    # --- bf16 compute path (recommended on v6e/v7x), f32 accumulation -------
    out_bf16 = convnet_forward(coords_np, feats, weights,
                               compute_dtype=jnp.bfloat16)
    out_bf16 = jax.block_until_ready(out_bf16)
    np.testing.assert_allclose(np.asarray(out_bf16), np.asarray(ref),
                               rtol=5e-2, atol=5e-2)

    print("KERNEL_OK")
</pallas_src>

<mosaic_0001>
module attributes {stable_mosaic.version = 11 : i64} {
  func.func @sparse_conv_kernel(%arg0: i32, %arg1: memref<128x128xf32, #tpu.memory_space<vmem>>, %arg2: memref<128x128xf32, #tpu.memory_space<vmem>>, %arg3: memref<128x128xf32, #tpu.memory_space<vmem>>) attributes {dimension_semantics = [#tpu.dimension_semantics<parallel>], iteration_bounds = array<i64: 1>, scalar_prefetch = 0 : i64, scratch_operands = 0 : i64, tpu.core_type = #tpu.core_type<tc>, window_params = [{transform_indices = @transform_0, window_bounds = array<i64: 128, 128>}, {pipeline_mode = #tpu.pipeline_mode<synchronous>, transform_indices = @transform_1, window_bounds = array<i64: 128, 128>}, {transform_indices = @transform_2, window_bounds = array<i64: 128, 128>}]} {
    %c0 = arith.constant 0 : index
    %c0_0 = arith.constant 0 : index
    %0 = vector.load %arg1[%c0, %c0_0] : memref<128x128xf32, #tpu.memory_space<vmem>>, vector<128x128xf32>
    %c0_1 = arith.constant 0 : index
    %c0_2 = arith.constant 0 : index
    %1 = vector.load %arg2[%c0_1, %c0_2] : memref<128x128xf32, #tpu.memory_space<vmem>>, vector<128x128xf32>
    %cst = arith.constant dense<0.000000e+00> : vector<128x128xf32>
    %2 = tpu.matmul %0, %1, %cst {dimension_numbers = #tpu.dot_dimension_numbers<[1], [0], [0], [1], [0, 0, 1, 1], [], []>} : vector<128x128xf32>, vector<128x128xf32>, vector<128x128xf32> -> vector<128x128xf32>
    %c0_3 = arith.constant 0 : index
    %c0_4 = arith.constant 0 : index
    %3 = vector.load %arg3[%c0_3, %c0_4] : memref<128x128xf32, #tpu.memory_space<vmem>>, vector<128x128xf32>
    tpu.vector_store %arg3[%c0_3, %c0_4], %2 {strides = array<i32>} : memref<128x128xf32, #tpu.memory_space<vmem>>, vector<128x128xf32>,
    return
  }
  func.func @transform_0(%arg0: i32) -> (i32, i32) {
    %c0_i32 = arith.constant 0 : i32
    %c0_i32_0 = arith.constant 0 : i32
    return %arg0, %c0_i32 : i32, i32
  }
  func.func @transform_1(%arg0: i32) -> (i32, i32) {
    %c0_i32 = arith.constant 0 : i32
    %c0_i32_0 = arith.constant 0 : i32
    %c0_i32_1 = arith.constant 0 : i32
    return %c0_i32, %c0_i32_0 : i32, i32
  }
  func.func @transform_2(%arg0: i32) -> (i32, i32) {
    %c0_i32 = arith.constant 0 : i32
    %c0_i32_0 = arith.constant 0 : i32
    return %arg0, %c0_i32 : i32, i32
  }
}

</mosaic_0001>

<llo_original>
// kernel: tpu_custom_call.1
$region0: #{tpu_custom_call.1}
  #allocation0 [shape = 'u32[]', space=smem, size = 0x4, offset = 0x4, fixed_abs, tag = 'smem constant byte address 0x4 - core index']
  #allocation1 [shape = 'u32[72,128]{1,0:T(1,128)}', space=vmem, size = 0x9000, scoped, tag = 'internal scratch']
  %s0 = inlined_call_operand.hbm [shape: f32[128,128], index: 0, kind: input, shape index: {}]
  %s1 = inlined_call_operand.hbm [shape: f32[128,128], index: 1, kind: input, shape index: {}]
  %s2 = inlined_call_operand.hbm [shape: f32[128,128], index: 2, kind: output, shape index: {}]
  %s3 = sld [smem:[#allocation0]]
  $region26: #{tpu_custom_call.1} parent=0
    _
  %s5 = ssub.s32 1, %s3
  %s6 = scalar_select 0, %s5, %s3
  $region1: #{tpu_custom_call.1} parent=0
    #allocation2 [shape = 'u8[65536]{0}', space=vmem, size = 0x10000, scoped, tag = 'input window, operand 0, single buffered']
    #allocation3 [shape = 's32[1]{0}', space=sflag, size = 0x4, scoped, tag = 'scoped memory for tpu_custom_call.1']
    #allocation4 [shape = 's32[1]{0}', space=sflag, size = 0x4, scoped, tag = 'scoped memory for tpu_custom_call.1']
    #allocation5 [shape = 'u8[65536]{0}', space=vmem, size = 0x10000, scoped, tag = 'input window, operand 1, single buffered']
    #allocation6 [shape = 's32[1]{0}', space=sflag, size = 0x4, scoped, tag = 'scoped memory for tpu_custom_call.1']
    #allocation7 [shape = 'u8[65536]{0}', space=vmem, size = 0x10000, scoped, tag = 'output window, operand 0, single buffered']
    %7 = vsyncpa [#allocation3], 0
    %8 = vsyncpa [#allocation6], 0
    %9 = vsyncpa [#allocation4], 0
    // Predicated region
    $region2: #{tpu_custom_call.1} parent=1 // pred_check
      _
    $region3: #{tpu_custom_call.1} parent=1 // pred_check_branch
      %11 = sbr.rel (0) target = $region5
    $region4: #{tpu_custom_call.1} parent=1 // pred_region
      %13 = vsyncadd [#allocation3], 0
      %s14 = sshll.u32 %s0, 4
      %s15 = int_to_ptr.hbm [resolvable:$true] %s14
      %s16 = sshll.u32 [#allocation2], 4
      %s17 = int_to_ptr.vmem [resolvable:$true] %s16
      %22 = dma.hbm_to_vmem [thread:$0]  %s15, 2048, %s17, [#allocation3], 128, 128, 8
    $region5: #{tpu_custom_call.1} parent=1 // pred_fallthru
      _
    // Predicated region
    $region6: #{tpu_custom_call.1} parent=1 // pred_check
      _
    $region7: #{tpu_custom_call.1} parent=1 // pred_check_branch
      %24 = sbr.rel (0) target = $region9
    $region8: #{tpu_custom_call.1} parent=1 // pred_region
      %26 = vsyncadd [#allocation6], 0
      %s27 = sshll.u32 %s1, 4
      %s28 = int_to_ptr.hbm [resolvable:$true] %s27
      %s29 = sshll.u32 [#allocation5], 4
      %s30 = int_to_ptr.vmem [resolvable:$true] %s29
      %35 = dma.hbm_to_vmem [thread:$0]  %s28, 2048, %s30, [#allocation6], 128, 128, 8
    $region9: #{tpu_custom_call.1} parent=1 // pred_fallthru
      _
    // Predicated region
    $region10: #{tpu_custom_call.1} parent=1 // pred_check
      _
    $region11: #{tpu_custom_call.1} parent=1 // pred_check_branch
      %37 = sbr.rel (0) target = $region13
    $region12: #{tpu_custom_call.1} parent=1 // pred_region
      %39 = dma.done [#allocation3], 2048
    $region13: #{tpu_custom_call.1} parent=1 // pred_fallthru
      _
    // Predicated region
    $region14: #{tpu_custom_call.1} parent=1 // pred_check
      _
    $region15: #{tpu_custom_call.1} parent=1 // pred_check_branch
      %41 = sbr.rel (0) target = $region17
    $region16: #{tpu_custom_call.1} parent=1 // pred_region
      %43 = dma.done [#allocation6], 2048
    $region17: #{tpu_custom_call.1} parent=1 // pred_fallthru
      _
    %v44 = vld [vmem:[#allocation2] sm:$0xff]
    %v45 = vld [vmem:[#allocation2 + $0x8] sm:$0xff]
    %v46 = vld [vmem:[#allocation2 + $0x10] sm:$0xff]
    %v47 = vld [vmem:[#allocation2 + $0x18] sm:$0xff]
    %v48 = vld [vmem:[#allocation2 + $0x20] sm:$0xff]
    %v49 = vld [vmem:[#allocation2 + $0x28] sm:$0xff]
    %v50 = vld [vmem:[#allocation2 + $0x30] sm:$0xff]
    %v51 = vld [vmem:[#allocation2 + $0x38] sm:$0xff]
    %v52 = vld [vmem:[#allocation2 + $0x40] sm:$0xff]
    %v53 = vld [vmem:[#allocation2 + $0x48] sm:$0xff]
    %v54 = vld [vmem:[#allocation2 + $0x50] sm:$0xff]
    %v55 = vld [vmem:[#allocation2 + $0x58] sm:$0xff]
    %v56 = vld [vmem:[#allocation2 + $0x60] sm:$0xff]
    %v57 = vld [vmem:[#allocation2 + $0x68] sm:$0xff]
    %v58 = vld [vmem:[#allocation2 + $0x70] sm:$0xff]
    %v59 = vld [vmem:[#allocation2 + $0x78] sm:$0xff]
    %v60 = vld [vmem:[#allocation5] sm:$0xff]
    %v61 = vld [vmem:[#allocation5 + $0x8] sm:$0xff]
    %v62 = vld [vmem:[#allocation5 + $0x10] sm:$0xff]
    %v63 = vld [vmem:[#allocation5 + $0x18] sm:$0xff]
    %v64 = vld [vmem:[#allocation5 + $0x20] sm:$0xff]
    %v65 = vld [vmem:[#allocation5 + $0x28] sm:$0xff]
    %v66 = vld [vmem:[#allocation5 + $0x30] sm:$0xff]
    %v67 = vld [vmem:[#allocation5 + $0x38] sm:$0xff]
    %v68 = vld [vmem:[#allocation5 + $0x40] sm:$0xff]
    %v69 = vld [vmem:[#allocation5 + $0x48] sm:$0xff]
    %v70 = vld [vmem:[#allocation5 + $0x50] sm:$0xff]
    %v71 = vld [vmem:[#allocation5 + $0x58] sm:$0xff]
    %v72 = vld [vmem:[#allocation5 + $0x60] sm:$0xff]
    %v73 = vld [vmem:[#allocation5 + $0x68] sm:$0xff]
    %v74 = vld [vmem:[#allocation5 + $0x70] sm:$0xff]
    %v75 = vld [vmem:[#allocation5 + $0x78] sm:$0xff]
    %76 = vmatpush.msra.mxu0 %v75
    %77 = vmatpush.msra.mxu0 %v74
    %78 = vmatpush.msra.mxu0 %v73
    %79 = vmatpush.msra.mxu0 %v72
    %80 = vmatpush.msra.mxu0 %v71
    %81 = vmatpush.msra.mxu0 %v70
    %82 = vmatpush.msra.mxu0 %v69
    %83 = vmatpush.msra.mxu0 %v68
    %84 = vmatpush.msra.mxu0 %v67
    %85 = vmatpush.msra.mxu0 %v66
    %86 = vmatpush.msra.mxu0 %v65
    %87 = vmatpush.msra.mxu0 %v64
    %88 = vmatpush.msra.mxu0 %v63
    %89 = vmatpush.msra.mxu0 %v62
    %90 = vmatpush.msra.mxu0 %v61
    %91 = vmatpush.msra.mxu0 %v60
    %92 = vmatmul.f32.gmra.mxu0 %v44
    %v93 = vpop.f32.mrf.mxu0
    %v94 = vadd.f32 0.0, %v93
    %95 = vmatmul.f32.gmra.mxu0 %v45
    %v96 = vpop.f32.mrf.mxu0
    %v97 = vadd.f32 0.0, %v96
    %98 = vmatmul.f32.gmra.mxu0 %v46
    %v99 = vpop.f32.mrf.mxu0
    %v100 = vadd.f32 0.0, %v99
    %101 = vmatmul.f32.gmra.mxu0 %v47
    %v102 = vpop.f32.mrf.mxu0
    %v103 = vadd.f32 0.0, %v102
    %104 = vmatmul.f32.gmra.mxu0 %v48
    %v105 = vpop.f32.mrf.mxu0
    %v106 = vadd.f32 0.0, %v105
    %107 = vmatmul.f32.gmra.mxu0 %v49
    %v108 = vpop.f32.mrf.mxu0
    %v109 = vadd.f32 0.0, %v108
    %110 = vmatmul.f32.gmra.mxu0 %v50
    %v111 = vpop.f32.mrf.mxu0
    %v112 = vadd.f32 0.0, %v111
    %113 = vmatmul.f32.gmra.mxu0 %v51
    %v114 = vpop.f32.mrf.mxu0
    %v115 = vadd.f32 0.0, %v114
    %116 = vmatmul.f32.gmra.mxu0 %v52
    %v117 = vpop.f32.mrf.mxu0
    %v118 = vadd.f32 0.0, %v117
    %119 = vmatmul.f32.gmra.mxu0 %v53
    %v120 = vpop.f32.mrf.mxu0
    %v121 = vadd.f32 0.0, %v120
    %122 = vmatmul.f32.gmra.mxu0 %v54
    %v123 = vpop.f32.mrf.mxu0
    %v124 = vadd.f32 0.0, %v123
    %125 = vmatmul.f32.gmra.mxu0 %v55
    %v126 = vpop.f32.mrf.mxu0
    %v127 = vadd.f32 0.0, %v126
    %128 = vmatmul.f32.gmra.mxu0 %v56
    %v129 = vpop.f32.mrf.mxu0
    %v130 = vadd.f32 0.0, %v129
    %131 = vmatmul.f32.gmra.mxu0 %v57
    %v132 = vpop.f32.mrf.mxu0
    %v133 = vadd.f32 0.0, %v132
    %134 = vmatmul.f32.gmra.mxu0 %v58
    %v135 = vpop.f32.mrf.mxu0
    %v136 = vadd.f32 0.0, %v135
    %137 = vmatmul.f32.gmra.mxu0 %v59
    %v138 = vpop.f32.mrf.mxu0
    %v139 = vadd.f32 0.0, %v138
    %140 = vdwg.mxu0
    %141 = vst [vmem:[#allocation7] sm:$0xff] %v94
    %142 = vst [vmem:[#allocation7 + $0x8] sm:$0xff] %v97
    %143 = vst [vmem:[#allocation7 + $0x10] sm:$0xff] %v100
    %144 = vst [vmem:[#allocation7 + $0x18] sm:$0xff] %v103
    %145 = vst [vmem:[#allocation7 + $0x20] sm:$0xff] %v106
    %146 = vst [vmem:[#allocation7 + $0x28] sm:$0xff] %v109
    %147 = vst [vmem:[#allocation7 + $0x30] sm:$0xff] %v112
    %148 = vst [vmem:[#allocation7 + $0x38] sm:$0xff] %v115
    %149 = vst [vmem:[#allocation7 + $0x40] sm:$0xff] %v118
    %150 = vst [vmem:[#allocation7 + $0x48] sm:$0xff] %v121
    %151 = vst [vmem:[#allocation7 + $0x50] sm:$0xff] %v124
    %152 = vst [vmem:[#allocation7 + $0x58] sm:$0xff] %v127
    %153 = vst [vmem:[#allocation7 + $0x60] sm:$0xff] %v130
    %154 = vst [vmem:[#allocation7 + $0x68] sm:$0xff] %v133
    %155 = vst [vmem:[#allocation7 + $0x70] sm:$0xff] %v136
    %156 = vst [vmem:[#allocation7 + $0x78] sm:$0xff] %v139
    // Predicated region
    $region18: #{tpu_custom_call.1} parent=1 // pred_check
      _
    $region19: #{tpu_custom_call.1} parent=1 // pred_check_branch
      %158 = sbr.rel (0) target = $region21
    $region20: #{tpu_custom_call.1} parent=1 // pred_region
      %160 = vsyncadd [#allocation4], 0
      %s161 = sshll.u32 [#allocation7], 4
      %s162 = int_to_ptr.vmem [resolvable:$true] %s161
      %s163 = sshll.u32 %s2, 4
      %s164 = int_to_ptr.hbm [resolvable:$true] %s163
      %169 = dma.vmem_to_hbm [thread:$0]  %s162, 2048, %s164, [#allocation4], 128, 128, 8
    $region21: #{tpu_custom_call.1} parent=1 // pred_fallthru
      _
    // Predicated region
    $region22: #{tpu_custom_call.1} parent=1 // pred_check
      _
    $region23: #{tpu_custom_call.1} parent=1 // pred_check_branch
      %171 = sbr.rel (0) target = $region25
    $region24: #{tpu_custom_call.1} parent=1 // pred_region
      %173 = dma.done [#allocation4], 2048
    $region25: #{tpu_custom_call.1} parent=1 // pred_fallthru
      _
    %174 = vsyncpa [#allocation3], 1
    %175 = vsyncpa [#allocation6], 1
    %176 = vsyncpa [#allocation4], 1

</llo_original>
